<compile_context>
chip_gen: v6e
topology: v6e:2x2x1
jax: 0.10.0
libtpu: 0.0.40
codegen_flags: <defaults>
</compile_context>

<pallas_src>
import jax
import jax.numpy as jnp
import numpy as np
from jax import lax
from jax.experimental import pallas as pl
from jax.experimental.pallas import tpu as pltpu


def _round_up(n: int, m: int) -> int:
    return ((n + m - 1) // m) * m


# ----------------------------- fused Pallas kernel ---------------------------

def _make_gcn_kernel(compute_dtype):
    """Fused, E-tiled GCNConv forward.

    Grid = (2, num_edge_tiles):
      phase 0: accumulate in-degree into a lane-dense [1, N] scratch.
      phase 1: per edge tile, build one-hots, gather / message / scatter, accumulate;
               on the last tile, exp() the log-product accumulator and apply v().
    """

    def kernel(x_ref, w12_ref, wv_ref, b12_ref, bv_ref, tbl_ref, edges_ref,
               o_ref, xproj_ref, deg_ref, dinv_ref, sum_ref, logp_ref, msg_ref):
        phase = pl.program_id(0)
        et = pl.program_id(1)
        n_et = pl.num_programs(1)

        n_pad, d_pad = o_ref.shape          # padded node count / lane-dense feature dim
        te = edges_ref.shape[0]             # edge-tile size
        v_pad = tbl_ref.shape[0]            # padded combined bond vocabulary
        n_feat = edges_ref.shape[1] - 2     # number of bond features

        # ---- one-time init: fused projection matmul + accumulator zeroing ----
        @pl.when((phase == 0) & (et == 0))
        def _init():
            # single [N,D] @ [D,2D] MXU matmul for x@w1 and x@w2 (w1||w2 concat)
            xproj_ref[...] = (jnp.dot(x_ref[...], w12_ref[...],
                                      preferred_element_type=jnp.float32)
                              + b12_ref[...]).astype(xproj_ref.dtype)
            deg_ref[...] = jnp.zeros_like(deg_ref)
            sum_ref[...] = jnp.zeros_like(sum_ref)
            logp_ref[...] = jnp.zeros_like(logp_ref)

        col = edges_ref[:, 1:2]                                        # [TE, 1] int32
        iota_n = lax.broadcasted_iota(jnp.int32, (te, n_pad), 1)
        c_mask = col == iota_n                                         # [TE, N] target one-hot

        # ---- phase 0: degree via sublane reduce (no 1-lane MXU matmul) ----
        @pl.when(phase == 0)
        def _degree():
            deg_ref[...] += jnp.sum(c_mask.astype(jnp.float32), axis=0, keepdims=True)

        # ---- phase 1, first tile: deg^-1/2 (isolated / padded nodes -> 0) ----
        @pl.when((phase == 1) & (et == 0))
        def _norm_init():
            d = deg_ref[...]
            dinv_ref[...] = jnp.where(d > 0.0, lax.rsqrt(d), 0.0)

        # ---- phase 1: per-edge-tile message + aggregation ----
        @pl.when(phase == 1)
        def _edge_tile():
            row = edges_ref[:, 0:1]                                    # [TE, 1] int32
            r_mask = row == iota_n                                     # [TE, N] source one-hot
            dinv = dinv_ref[...]                                       # [1, N] lane-dense

            # gather dinv[row], dinv[col] with lane reduces (VPU/XLU, off the MXU)
            dinv_row = jnp.sum(jnp.where(r_mask, dinv, 0.0), axis=1, keepdims=True)
            dinv_col = jnp.sum(jnp.where(c_mask, dinv, 0.0), axis=1, keepdims=True)
            norm = dinv_row * dinv_col                                 # [TE, 1]

            # bond encoder: combined multi-hot embedding lookup on the MXU
            iota_v = lax.broadcasted_iota(jnp.int32, (te, v_pad), 1)
            oh = (edges_ref[:, 2:3] == iota_v).astype(jnp.float32)
            for f in range(1, n_feat):
                oh += (edges_ref[:, 2 + f:3 + f] == iota_v).astype(jnp.float32)
            e_emb = jnp.dot(oh.astype(compute_dtype), tbl_ref[...],
                            preferred_element_type=jnp.float32)        # [TE, D] f32

            # gather BOTH projections with one [TE,N] @ [N,2D] MXU matmul
            r_oh = r_mask.astype(jnp.float32).astype(compute_dtype)
            xj = jnp.dot(r_oh, xproj_ref[...],
                         preferred_element_type=jnp.float32)           # [TE, 2D]

            msg_s = norm * jnp.maximum(xj[:, :d_pad] + e_emb, 0.0)
            msg_p = norm * jnp.maximum(xj[:, d_pad:] + e_emb, 0.0)
            # scatter-multiply in log space; clamp log(0) to a finite large-negative so
            # exact-zero one-hot entries never multiply -inf (exp of the sum -> 0).
            log_p = jnp.where(msg_p > 0.0, jnp.log(msg_p), -1e30)

            # pack [msg_s || log_p] so the scatter is ONE C^T @ [TE,2D] matmul
            msg_ref[:, :d_pad] = msg_s.astype(msg_ref.dtype)
            msg_ref[:, d_pad:] = log_p.astype(msg_ref.dtype)
            c_oh = c_mask.astype(jnp.float32).astype(compute_dtype)
            agg = lax.dot_general(c_oh, msg_ref[...], (((0,), (0,)), ((), ())),
                                  preferred_element_type=jnp.float32)  # [N, 2D]
            sum_ref[...] += agg[:, :d_pad]
            logp_ref[...] += agg[:, d_pad:]

            # ---- finalize on the last edge tile ----
            @pl.when(et == n_et - 1)
            def _finalize():
                prod_agg = jnp.exp(logp_ref[...])    # nodes with no edges -> exp(0)=1
                o_ref[...] = (jnp.dot(prod_agg, wv_ref[...],
                                      preferred_element_type=jnp.float32)
                              + bv_ref[...] + sum_ref[...])

    return kernel


# ----------------------------- one-time parameter prep -----------------------

def prepare_gcn_params(params, compute_dtype=jnp.float32):
    """Done once, outside the per-call path: transpose nn.Linear weights to [Din, Dout],
    zero-pad feature dims to a lane-dense multiple of 128, concatenate w1||w2 (and b1||b2)
    for the fused projection matmul, and concatenate the bond embedding tables into one
    offset-indexed table (cast to bf16 when the bf16-MXU fast path is requested)."""
    d = params["w1"].shape[0]
    d_pad = _round_up(d, 128)

    def prep_w(w):                       # nn.Linear stores [Dout, Din]
        wt = jnp.asarray(w, jnp.float32).T
        return jnp.pad(wt, ((0, d_pad - wt.shape[0]), (0, d_pad - wt.shape[1])))

    def prep_b(b):
        b = jnp.asarray(b, jnp.float32).reshape(1, -1)
        return jnp.pad(b, ((0, 0), (0, d_pad - b.shape[1])))

    tables = params["bond_tables"]
    vocab = [int(t.shape[0]) for t in tables]
    offsets = np.cumsum([0] + vocab[:-1]).astype(np.int32)
    total_vocab = int(sum(vocab))
    tbl = jnp.concatenate([jnp.asarray(t, jnp.float32) for t in tables], axis=0)
    v_pad = _round_up(total_vocab, 8)
    tbl = jnp.pad(tbl, ((0, v_pad - total_vocab), (0, d_pad - tbl.shape[1])))

    return {
        "w12": jnp.concatenate([prep_w(params["w1"]), prep_w(params["w2"])], axis=1),
        "b12": jnp.concatenate([prep_b(params["b1"]), prep_b(params["b2"])], axis=1),
        "wv": prep_w(params["wv"]),
        "bv": prep_b(params["bv"]),
        "bond_table": tbl.astype(compute_dtype),
        "bond_offsets": jnp.asarray(offsets, jnp.int32),
        "total_vocab": total_vocab, "v_pad": v_pad,
        "d_model": d, "d_pad": d_pad, "compute_dtype": compute_dtype,
    }


# ----------------------------- forward wrapper --------------------------------

def gcn_conv_forward(prep, x, edge_index, edge_attr, *, edge_tile=512):
    n, d = x.shape
    e = edge_index.shape[1]
    f = edge_attr.shape[1]
    d_pad = prep["d_pad"]
    v_pad = prep["v_pad"]
    cdt = prep["compute_dtype"]

    n_pad = _round_up(n, 8)
    te = _round_up(min(edge_tile, e), 8)      # edge-tile size (sublane multiple)
    e_pad = _round_up(e, te)
    n_et = e_pad // te

    x_p = jnp.pad(x.astype(jnp.float32), ((0, n_pad - n), (0, d_pad - d)))

    # Pack [row, col, attr_0..attr_{F-1}] into ONE [E_pad, F+2] int32 ref (one DMA per tile).
    # Padded edges: row = col = n_pad (never matches the 0..n_pad-1 iota -> fully inert) and
    # attr = total_vocab (zero-padded / out-of-range table row -> zero embedding).
    ea = edge_attr.astype(jnp.int32) + prep["bond_offsets"][None, :]
    edges = jnp.concatenate([edge_index.astype(jnp.int32).T, ea], axis=1)
    if e_pad > e:
        pad_row = jnp.array([[n_pad, n_pad] + [prep["total_vocab"]] * f], jnp.int32)
        edges = jnp.concatenate([edges, jnp.tile(pad_row, (e_pad - e, 1))], axis=0)

    grid_spec = pltpu.PrefetchScalarGridSpec(
        num_scalar_prefetch=0,
        grid=(2, n_et),   # (phase, edge-tile); both sequential / accumulating
        in_specs=[
            pl.BlockSpec((n_pad, d_pad), lambda p, t: (0, 0)),           # x (resident)
            pl.BlockSpec((d_pad, 2 * d_pad), lambda p, t: (0, 0)),       # w1||w2
            pl.BlockSpec((d_pad, d_pad), lambda p, t: (0, 0)),           # wv
            pl.BlockSpec((1, 2 * d_pad), lambda p, t: (0, 0)),           # b1||b2
            pl.BlockSpec((1, d_pad), lambda p, t: (0, 0)),               # bv
            pl.BlockSpec((v_pad, d_pad), lambda p, t: (0, 0)),           # bond table
            pl.BlockSpec((te, f + 2), lambda p, t: (t, 0)),              # packed edge tiles
        ],
        out_specs=pl.BlockSpec((n_pad, d_pad), lambda p, t: (0, 0)),     # resident accumulator
        scratch_shapes=[
            pltpu.VMEM((n_pad, 2 * d_pad), cdt),      # fused x@[w1||w2] projections
            pltpu.VMEM((1, n_pad), jnp.float32),      # degree (lane-dense [1, N])
            pltpu.VMEM((1, n_pad), jnp.float32),      # deg^-1/2
            pltpu.VMEM((n_pad, d_pad), jnp.float32),  # scatter-add accumulator
            pltpu.VMEM((n_pad, d_pad), jnp.float32),  # scatter-multiply (log) accumulator
            pltpu.VMEM((te, 2 * d_pad), cdt),         # packed [msg_s || log_p] per tile
        ],
    )
    out = pl.pallas_call(
        _make_gcn_kernel(cdt),
        out_shape=jax.ShapeDtypeStruct((n_pad, d_pad), jnp.float32),
        grid_spec=grid_spec,
        compiler_params=pltpu.CompilerParams(
            dimension_semantics=("arbitrary", "arbitrary"),
            vmem_limit_bytes=32 * 1024 * 1024),
    )(x_p, prep["w12"], prep["wv"], prep["b12"], prep["bv"], prep["bond_table"], edges)
    # TODO(synk): for v7x megacore, add an independent "parallel" grid axis over N-tiles
    # (per-core partitioned accumulators) so both TensorCores take half the edge work;
    # on v5e consider pipeline_mode=pl.Buffered(3) on the edge-tile spec.
    return out[:n, :d]


# ----------------------------- pure-JAX reference -----------------------------

def bond_encoder_ref(edge_attr, tables):
    out = jnp.zeros((edge_attr.shape[0], tables[0].shape[1]), jnp.float32)
    for i, tbl in enumerate(tables):
        out = out + jnp.take(tbl, edge_attr[:, i], axis=0)
    return out


def gcn_conv_reference(params, x, edge_index, edge_attr):
    N, D = x.shape
    x_sum = x @ params["w1"].T + params["b1"]
    x_prod = x @ params["w2"].T + params["b2"]
    edge_emb = bond_encoder_ref(edge_attr, params["bond_tables"])
    row, col = edge_index[0], edge_index[1]
    deg = jnp.zeros((N,), jnp.float32).at[col].add(1.0)
    dinv = jnp.where(deg > 0.0, deg ** -0.5, 0.0)
    norm = (dinv[row] * dinv[col])[:, None]
    msg_s = norm * jax.nn.relu(x_sum[row] + edge_emb)
    msg_p = norm * jax.nn.relu(x_prod[row] + edge_emb)
    sum_agg = jnp.zeros((N, D), jnp.float32).at[col].add(msg_s)
    prod_agg = jnp.ones((N, D), jnp.float32).at[col].multiply(msg_p)
    return prod_agg @ params["wv"].T + params["bv"] + sum_agg


# ----------------------------- main -------------------------------------------

if __name__ == "__main__":
    N, D, E = 8, 32, 24
    BOND_VOCABS = (5, 6, 2)

    key = jax.random.PRNGKey(0)
    keys = jax.random.split(key, 12)
    bound = 1.0 / float(np.sqrt(D))
    params = {
        "w1": jax.random.uniform(keys[0], (D, D), jnp.float32, -bound, bound),
        "b1": jax.random.uniform(keys[1], (D,), jnp.float32, -bound, bound),
        "w2": jax.random.uniform(keys[2], (D, D), jnp.float32, -bound, bound),
        "b2": jax.random.uniform(keys[3], (D,), jnp.float32, -bound, bound),
        "wv": jax.random.uniform(keys[4], (D, D), jnp.float32, -bound, bound),
        "bv": jax.random.uniform(keys[5], (D,), jnp.float32, -bound, bound),
        "bond_tables": [0.1 * jax.random.normal(keys[6 + i], (v, D), jnp.float32)
                        for i, v in enumerate(BOND_VOCABS)],
    }
    # TODO(synk): root_emb (Embedding(1, emb_dim)) is declared but unused in the
    # reference forward pass, so it is intentionally omitted.

    x = jax.random.normal(keys[9], (N, D), jnp.float32)
    edge_index = jax.random.randint(keys[10], (2, E), 0, N, jnp.int32)
    ekeys = jax.random.split(keys[11], len(BOND_VOCABS))
    edge_attr = jnp.stack(
        [jax.random.randint(ekeys[i], (E,), 0, v, jnp.int32)
         for i, v in enumerate(BOND_VOCABS)], axis=1)

    ref = gcn_conv_reference(params, x, edge_index, edge_attr)

    # f32 one-hot matmuls: exact gathers/scatters -> tight tolerance.
    # edge_tile=8 forces 3 edge tiles, exercising the accumulating E-grid.
    prep32 = prepare_gcn_params(params, compute_dtype=jnp.float32)
    out32 = jax.block_until_ready(
        gcn_conv_forward(prep32, x, edge_index, edge_attr, edge_tile=8))
    np.testing.assert_allclose(np.asarray(out32), np.asarray(ref), rtol=1e-4, atol=1e-4)

    # bf16 one-hot / gather / scatter matmuls (fast path for the bf16 MXUs on
    # v5e/v6e/v7x, f32 accumulation). edge_tile=16 also exercises padded edges.
    prep16 = prepare_gcn_params(params, compute_dtype=jnp.bfloat16)
    out16 = jax.block_until_ready(
        gcn_conv_forward(prep16, x, edge_index, edge_attr, edge_tile=16))
    np.testing.assert_allclose(np.asarray(out16), np.asarray(ref), rtol=5e-2, atol=5e-2)

    print("KERNEL_OK")
</pallas_src>

<mosaic_0001>
module attributes {stable_mosaic.version = 11 : i64} {
  func.func @kernel(%arg0: i32, %arg1: i32, %arg2: memref<8x128xf32, #tpu.memory_space<vmem>>, %arg3: memref<128x256xf32, #tpu.memory_space<vmem>>, %arg4: memref<128x128xf32, #tpu.memory_space<vmem>>, %arg5: memref<1x256xf32, #tpu.memory_space<vmem>>, %arg6: memref<1x128xf32, #tpu.memory_space<vmem>>, %arg7: memref<16x128xf32, #tpu.memory_space<vmem>>, %arg8: memref<8x5xi32, #tpu.memory_space<vmem>>, %arg9: memref<8x128xf32, #tpu.memory_space<vmem>>, %arg10: memref<8x256xf32, #tpu.memory_space<vmem>>, %arg11: memref<1x8xf32, #tpu.memory_space<vmem>>, %arg12: memref<1x8xf32, #tpu.memory_space<vmem>>, %arg13: memref<8x128xf32, #tpu.memory_space<vmem>>, %arg14: memref<8x128xf32, #tpu.memory_space<vmem>>, %arg15: memref<8x256xf32, #tpu.memory_space<vmem>>) attributes {dimension_semantics = [#tpu.dimension_semantics<arbitrary>, #tpu.dimension_semantics<arbitrary>], iteration_bounds = array<i64: 2, 3>, scalar_prefetch = 0 : i64, scratch_operands = 6 : i64, tpu.core_type = #tpu.core_type<tc>, window_params = [{pipeline_mode = #tpu.pipeline_mode<synchronous>, transform_indices = @transform_0, window_bounds = array<i64: 8, 128>}, {pipeline_mode = #tpu.pipeline_mode<synchronous>, transform_indices = @transform_1, window_bounds = array<i64: 128, 256>}, {pipeline_mode = #tpu.pipeline_mode<synchronous>, transform_indices = @transform_2, window_bounds = array<i64: 128, 128>}, {pipeline_mode = #tpu.pipeline_mode<synchronous>, transform_indices = @transform_3, window_bounds = array<i64: 1, 256>}, {pipeline_mode = #tpu.pipeline_mode<synchronous>, transform_indices = @transform_4, window_bounds = array<i64: 1, 128>}, {pipeline_mode = #tpu.pipeline_mode<synchronous>, transform_indices = @transform_5, window_bounds = array<i64: 16, 128>}, {transform_indices = @transform_6, window_bounds = array<i64: 8, 5>}, {pipeline_mode = #tpu.pipeline_mode<synchronous>, transform_indices = @transform_7, window_bounds = array<i64: 8, 128>}]} {
    %c0_i32 = arith.constant 0 : i32
    %0 = arith.cmpi eq, %arg0, %c0_i32 : i32
    %c0_i32_0 = arith.constant 0 : i32
    %1 = arith.cmpi eq, %arg1, %c0_i32_0 : i32
    %2 = arith.andi %0, %1 : i1
    %3 = arith.extui %2 : i1 to i32
    %c0_i32_1 = arith.constant 0 : i32
    %4 = arith.cmpi ne, %3, %c0_i32_1 : i32
    scf.if %4 {
      %c0_8 = arith.constant 0 : index
      %c0_9 = arith.constant 0 : index
      %20 = vector.load %arg2[%c0_8, %c0_9] : memref<8x128xf32, #tpu.memory_space<vmem>>, vector<8x128xf32>
      %c0_10 = arith.constant 0 : index
      %c0_11 = arith.constant 0 : index
      %21 = vector.load %arg3[%c0_10, %c0_11] : memref<128x256xf32, #tpu.memory_space<vmem>>, vector<128x256xf32>
      %cst = arith.constant dense<0.000000e+00> : vector<8x256xf32>
      %22 = tpu.matmul %20, %21, %cst {dimension_numbers = #tpu.dot_dimension_numbers<[1], [0], [0], [1], [0, 0, 1, 1], [], []>} : vector<8x128xf32>, vector<128x256xf32>, vector<8x256xf32> -> vector<8x256xf32>
      %c0_12 = arith.constant 0 : index
      %c0_13 = arith.constant 0 : index
      %23 = vector.load %arg5[%c0_12, %c0_13] : memref<1x256xf32, #tpu.memory_space<vmem>>, vector<1x256xf32>
      %24 = vector.broadcast %23 : vector<1x256xf32> to vector<8x256xf32>
      %25 = arith.addf %22, %24 : vector<8x256xf32>
      %c0_14 = arith.constant 0 : index
      %c0_15 = arith.constant 0 : index
      %26 = vector.load %arg10[%c0_14, %c0_15] : memref<8x256xf32, #tpu.memory_space<vmem>>, vector<8x256xf32>
      tpu.vector_store %arg10[%c0_14, %c0_15], %25 {strides = array<i32>} : memref<8x256xf32, #tpu.memory_space<vmem>>, vector<8x256xf32>,
      %cst_16 = arith.constant 0.000000e+00 : f32
      %27 = vector.broadcast %cst_16 : f32 to vector<1x8xf32>
      %c0_17 = arith.constant 0 : index
      %c0_18 = arith.constant 0 : index
      %28 = vector.load %arg11[%c0_17, %c0_18] : memref<1x8xf32, #tpu.memory_space<vmem>>, vector<1x8xf32>
      tpu.vector_store %arg11[%c0_17, %c0_18], %27 {strides = array<i32>} : memref<1x8xf32, #tpu.memory_space<vmem>>, vector<1x8xf32>,
      %cst_19 = arith.constant 0.000000e+00 : f32
      %29 = vector.broadcast %cst_19 : f32 to vector<8x128xf32>
      %c0_20 = arith.constant 0 : index
      %c0_21 = arith.constant 0 : index
      %30 = vector.load %arg13[%c0_20, %c0_21] : memref<8x128xf32, #tpu.memory_space<vmem>>, vector<8x128xf32>
      tpu.vector_store %arg13[%c0_20, %c0_21], %29 {strides = array<i32>} : memref<8x128xf32, #tpu.memory_space<vmem>>, vector<8x128xf32>,
      %cst_22 = arith.constant 0.000000e+00 : f32
      %31 = vector.broadcast %cst_22 : f32 to vector<8x128xf32>
      %c0_23 = arith.constant 0 : index
      %c0_24 = arith.constant 0 : index
      %32 = vector.load %arg14[%c0_23, %c0_24] : memref<8x128xf32, #tpu.memory_space<vmem>>, vector<8x128xf32>
      tpu.vector_store %arg14[%c0_23, %c0_24], %31 {strides = array<i32>} : memref<8x128xf32, #tpu.memory_space<vmem>>, vector<8x128xf32>,
    } else {
    }
    %c0 = arith.constant 0 : index
    %c1 = arith.constant 1 : index
    %5 = vector.load %arg8[%c0, %c1] : memref<8x5xi32, #tpu.memory_space<vmem>>, vector<8x1xi32>
    %6 = tpu.iota {dimensions = array<i32: 1>} : vector<8x8xi32>
    %7 = vector.broadcast %5 : vector<8x1xi32> to vector<8x8xi32>
    %8 = arith.cmpi eq, %7, %6 : vector<8x8xi32>
    %c0_i32_2 = arith.constant 0 : i32
    %9 = arith.cmpi eq, %arg0, %c0_i32_2 : i32
    %10 = arith.extui %9 : i1 to i32
    %c0_i32_3 = arith.constant 0 : i32
    %11 = arith.cmpi ne, %10, %c0_i32_3 : i32
    scf.if %11 {
      %c0_8 = arith.constant 0 : index
      %c0_9 = arith.constant 0 : index
      %20 = vector.load %arg11[%c0_8, %c0_9] : memref<1x8xf32, #tpu.memory_space<vmem>>, vector<1x8xf32>
      %21 = arith.extui %8 : vector<8x8xi1> to vector<8x8xi32>
      %22 = arith.sitofp %21 : vector<8x8xi32> to vector<8x8xf32>
      %cst = arith.constant dense<0.000000e+00> : vector<8xf32>
      %23 = vector.multi_reduction <add>, %22, %cst [0] : vector<8x8xf32> to vector<8xf32>
      %24 = vector.shape_cast %23 : vector<8xf32> to vector<1x8xf32>
      %25 = arith.addf %20, %24 : vector<1x8xf32>
      %c0_10 = arith.constant 0 : index
      %c0_11 = arith.constant 0 : index
      %26 = vector.load %arg11[%c0_10, %c0_11] : memref<1x8xf32, #tpu.memory_space<vmem>>, vector<1x8xf32>
      tpu.vector_store %arg11[%c0_10, %c0_11], %25 {strides = array<i32>} : memref<1x8xf32, #tpu.memory_space<vmem>>, vector<1x8xf32>,
    } else {
    }
    %c1_i32 = arith.constant 1 : i32
    %12 = arith.cmpi eq, %arg0, %c1_i32 : i32
    %c0_i32_4 = arith.constant 0 : i32
    %13 = arith.cmpi eq, %arg1, %c0_i32_4 : i32
    %14 = arith.andi %12, %13 : i1
    %15 = arith.extui %14 : i1 to i32
    %c0_i32_5 = arith.constant 0 : i32
    %16 = arith.cmpi ne, %15, %c0_i32_5 : i32
    scf.if %16 {
      %c0_8 = arith.constant 0 : index
      %c0_9 = arith.constant 0 : index
      %20 = vector.load %arg11[%c0_8, %c0_9] : memref<1x8xf32, #tpu.memory_space<vmem>>, vector<1x8xf32>
      %cst = arith.constant 0.000000e+00 : f32
      %21 = vector.broadcast %cst : f32 to vector<1x8xf32>
      %22 = arith.cmpf ogt, %20, %21 : vector<1x8xf32>
      %23 = math.rsqrt %20 : vector<1x8xf32>
      %cst_10 = arith.constant 0.000000e+00 : f32
      %24 = vector.broadcast %cst_10 : f32 to vector<1x8xf32>
      %25 = arith.select %22, %23, %24 : vector<1x8xi1>, vector<1x8xf32>
      %c0_11 = arith.constant 0 : index
      %c0_12 = arith.constant 0 : index
      %26 = vector.load %arg12[%c0_11, %c0_12] : memref<1x8xf32, #tpu.memory_space<vmem>>, vector<1x8xf32>
      tpu.vector_store %arg12[%c0_11, %c0_12], %25 {strides = array<i32>} : memref<1x8xf32, #tpu.memory_space<vmem>>, vector<1x8xf32>,
    } else {
    }
    %c1_i32_6 = arith.constant 1 : i32
    %17 = arith.cmpi eq, %arg0, %c1_i32_6 : i32
    %18 = arith.extui %17 : i1 to i32
    %c0_i32_7 = arith.constant 0 : i32
    %19 = arith.cmpi ne, %18, %c0_i32_7 : i32
    scf.if %19 {
      %c0_8 = arith.constant 0 : index
      %c0_9 = arith.constant 0 : index
      %20 = vector.load %arg8[%c0_8, %c0_9] : memref<8x5xi32, #tpu.memory_space<vmem>>, vector<8x1xi32>
      %21 = vector.broadcast %20 : vector<8x1xi32> to vector<8x8xi32>
      %22 = arith.cmpi eq, %21, %6 : vector<8x8xi32>
      %c0_10 = arith.constant 0 : index
      %c0_11 = arith.constant 0 : index
      %23 = vector.load %arg12[%c0_10, %c0_11] : memref<1x8xf32, #tpu.memory_space<vmem>>, vector<1x8xf32>
      %cst = arith.constant 0.000000e+00 : f32
      %24 = vector.shape_cast %23 : vector<1x8xf32> to vector<1x8xf32>
      %25 = vector.broadcast %24 : vector<1x8xf32> to vector<8x8xf32>
      %26 = vector.broadcast %cst : f32 to vector<8x8xf32>
      %27 = arith.select %22, %25, %26 : vector<8x8xi1>, vector<8x8xf32>
      %cst_12 = arith.constant dense<0.000000e+00> : vector<8xf32>
      %28 = vector.multi_reduction <add>, %27, %cst_12 [1] : vector<8x8xf32> to vector<8xf32>
      %29 = vector.shape_cast %28 : vector<8xf32> to vector<8x1xf32>
      %cst_13 = arith.constant 0.000000e+00 : f32
      %30 = vector.shape_cast %23 : vector<1x8xf32> to vector<1x8xf32>
      %31 = vector.broadcast %30 : vector<1x8xf32> to vector<8x8xf32>
      %32 = vector.broadcast %cst_13 : f32 to vector<8x8xf32>
      %33 = arith.select %8, %31, %32 : vector<8x8xi1>, vector<8x8xf32>
      %cst_14 = arith.constant dense<0.000000e+00> : vector<8xf32>
      %34 = vector.multi_reduction <add>, %33, %cst_14 [1] : vector<8x8xf32> to vector<8xf32>
      %35 = vector.shape_cast %34 : vector<8xf32> to vector<8x1xf32>
      %36 = arith.mulf %29, %35 : vector<8x1xf32>
      %37 = tpu.iota {dimensions = array<i32: 1>} : vector<8x16xi32>
      %c0_15 = arith.constant 0 : index
      %c2 = arith.constant 2 : index
      %38 = vector.load %arg8[%c0_15, %c2] : memref<8x5xi32, #tpu.memory_space<vmem>>, vector<8x1xi32>
      %39 = vector.broadcast %38 : vector<8x1xi32> to vector<8x16xi32>
      %40 = arith.cmpi eq, %39, %37 : vector<8x16xi32>
      %41 = arith.extui %40 : vector<8x16xi1> to vector<8x16xi32>
      %42 = arith.sitofp %41 : vector<8x16xi32> to vector<8x16xf32>
      %c0_16 = arith.constant 0 : index
      %c3 = arith.constant 3 : index
      %43 = vector.load %arg8[%c0_16, %c3] : memref<8x5xi32, #tpu.memory_space<vmem>>, vector<8x1xi32>
      %44 = vector.broadcast %43 : vector<8x1xi32> to vector<8x16xi32>
      %45 = arith.cmpi eq, %44, %37 : vector<8x16xi32>
      %46 = arith.extui %45 : vector<8x16xi1> to vector<8x16xi32>
      %47 = arith.sitofp %46 : vector<8x16xi32> to vector<8x16xf32>
      %48 = arith.addf %42, %47 : vector<8x16xf32>
      %c0_17 = arith.constant 0 : index
      %c4 = arith.constant 4 : index
      %49 = vector.load %arg8[%c0_17, %c4] : memref<8x5xi32, #tpu.memory_space<vmem>>, vector<8x1xi32>
      %50 = vector.broadcast %49 : vector<8x1xi32> to vector<8x16xi32>
      %51 = arith.cmpi eq, %50, %37 : vector<8x16xi32>
      %52 = arith.extui %51 : vector<8x16xi1> to vector<8x16xi32>
      %53 = arith.sitofp %52 : vector<8x16xi32> to vector<8x16xf32>
      %54 = arith.addf %48, %53 : vector<8x16xf32>
      %c0_18 = arith.constant 0 : index
      %c0_19 = arith.constant 0 : index
      %55 = vector.load %arg7[%c0_18, %c0_19] : memref<16x128xf32, #tpu.memory_space<vmem>>, vector<16x128xf32>
      %cst_20 = arith.constant dense<0.000000e+00> : vector<8x128xf32>
      %56 = tpu.matmul %54, %55, %cst_20 {dimension_numbers = #tpu.dot_dimension_numbers<[1], [0], [0], [1], [0, 0, 1, 1], [], []>} : vector<8x16xf32>, vector<16x128xf32>, vector<8x128xf32> -> vector<8x128xf32>
      %57 = arith.extui %22 : vector<8x8xi1> to vector<8x8xi32>
      %58 = arith.sitofp %57 : vector<8x8xi32> to vector<8x8xf32>
      %c0_21 = arith.constant 0 : index
      %c0_22 = arith.constant 0 : index
      %59 = vector.load %arg10[%c0_21, %c0_22] : memref<8x256xf32, #tpu.memory_space<vmem>>, vector<8x256xf32>
      %cst_23 = arith.constant dense<0.000000e+00> : vector<8x256xf32>
      %60 = tpu.matmul %58, %59, %cst_23 {dimension_numbers = #tpu.dot_dimension_numbers<[1], [0], [0], [1], [0, 0, 1, 1], [], []>} : vector<8x8xf32>, vector<8x256xf32>, vector<8x256xf32> -> vector<8x256xf32>
      %61 = vector.extract_strided_slice %60 {offsets = [0, 0], sizes = [8, 128], strides = [1, 1]} : vector<8x256xf32> to vector<8x128xf32>
      %62 = arith.addf %61, %56 : vector<8x128xf32>
      %cst_24 = arith.constant 0.000000e+00 : f32
      %63 = vector.broadcast %cst_24 : f32 to vector<8x128xf32>
      %64 = arith.maximumf %62, %63 : vector<8x128xf32>
      %65 = vector.broadcast %36 : vector<8x1xf32> to vector<8x128xf32>
      %66 = arith.mulf %65, %64 : vector<8x128xf32>
      %67 = vector.extract_strided_slice %60 {offsets = [0, 128], sizes = [8, 128], strides = [1, 1]} : vector<8x256xf32> to vector<8x128xf32>
      %68 = arith.addf %67, %56 : vector<8x128xf32>
      %cst_25 = arith.constant 0.000000e+00 : f32
      %69 = vector.broadcast %cst_25 : f32 to vector<8x128xf32>
      %70 = arith.maximumf %68, %69 : vector<8x128xf32>
      %71 = vector.broadcast %36 : vector<8x1xf32> to vector<8x128xf32>
      %72 = arith.mulf %71, %70 : vector<8x128xf32>
      %cst_26 = arith.constant 0.000000e+00 : f32
      %73 = vector.broadcast %cst_26 : f32 to vector<8x128xf32>
      %74 = arith.cmpf ogt, %72, %73 : vector<8x128xf32>
      %75 = math.log %72 : vector<8x128xf32>
      %cst_27 = arith.constant -1.000000e+30 : f32
      %76 = vector.broadcast %cst_27 : f32 to vector<8x128xf32>
      %77 = arith.select %74, %75, %76 : vector<8x128xi1>, vector<8x128xf32>
      %c0_28 = arith.constant 0 : index
      %c0_29 = arith.constant 0 : index
      %78 = vector.load %arg15[%c0_28, %c0_29] : memref<8x256xf32, #tpu.memory_space<vmem>>, vector<8x128xf32>
      tpu.vector_store %arg15[%c0_28, %c0_29], %66 {strides = array<i32>} : memref<8x256xf32, #tpu.memory_space<vmem>>, vector<8x128xf32>,
      %c0_30 = arith.constant 0 : index
      %c128 = arith.constant 128 : index
      %79 = vector.load %arg15[%c0_30, %c128] : memref<8x256xf32, #tpu.memory_space<vmem>>, vector<8x128xf32>
      tpu.vector_store %arg15[%c0_30, %c128], %77 {strides = array<i32>} : memref<8x256xf32, #tpu.memory_space<vmem>>, vector<8x128xf32>,
      %80 = arith.extui %8 : vector<8x8xi1> to vector<8x8xi32>
      %81 = arith.sitofp %80 : vector<8x8xi32> to vector<8x8xf32>
      %c0_31 = arith.constant 0 : index
      %c0_32 = arith.constant 0 : index
      %82 = vector.load %arg15[%c0_31, %c0_32] : memref<8x256xf32, #tpu.memory_space<vmem>>, vector<8x256xf32>
      %cst_33 = arith.constant dense<0.000000e+00> : vector<8x256xf32>
      %83 = tpu.matmul %81, %82, %cst_33 {dimension_numbers = #tpu.dot_dimension_numbers<[0], [0], [1], [1], [0, 1, 1, 1], [], []>} : vector<8x8xf32>, vector<8x256xf32>, vector<8x256xf32> -> vector<8x256xf32>
      %c0_34 = arith.constant 0 : index
      %c0_35 = arith.constant 0 : index
      %84 = vector.load %arg13[%c0_34, %c0_35] : memref<8x128xf32, #tpu.memory_space<vmem>>, vector<8x128xf32>
      %85 = vector.extract_strided_slice %83 {offsets = [0, 0], sizes = [8, 128], strides = [1, 1]} : vector<8x256xf32> to vector<8x128xf32>
      %86 = arith.addf %84, %85 : vector<8x128xf32>
      %c0_36 = arith.constant 0 : index
      %c0_37 = arith.constant 0 : index
      %87 = vector.load %arg13[%c0_36, %c0_37] : memref<8x128xf32, #tpu.memory_space<vmem>>, vector<8x128xf32>
      tpu.vector_store %arg13[%c0_36, %c0_37], %86 {strides = array<i32>} : memref<8x128xf32, #tpu.memory_space<vmem>>, vector<8x128xf32>,
      %c0_38 = arith.constant 0 : index
      %c0_39 = arith.constant 0 : index
      %88 = vector.load %arg14[%c0_38, %c0_39] : memref<8x128xf32, #tpu.memory_space<vmem>>, vector<8x128xf32>
      %89 = vector.extract_strided_slice %83 {offsets = [0, 128], sizes = [8, 128], strides = [1, 1]} : vector<8x256xf32> to vector<8x128xf32>
      %90 = arith.addf %88, %89 : vector<8x128xf32>
      %c0_40 = arith.constant 0 : index
      %c0_41 = arith.constant 0 : index
      %91 = vector.load %arg14[%c0_40, %c0_41] : memref<8x128xf32, #tpu.memory_space<vmem>>, vector<8x128xf32>
      tpu.vector_store %arg14[%c0_40, %c0_41], %90 {strides = array<i32>} : memref<8x128xf32, #tpu.memory_space<vmem>>, vector<8x128xf32>,
      %c2_i32 = arith.constant 2 : i32
      %92 = arith.cmpi eq, %arg1, %c2_i32 : i32
      %93 = arith.extui %92 : i1 to i32
      %c0_i32_42 = arith.constant 0 : i32
      %94 = arith.cmpi ne, %93, %c0_i32_42 : i32
      scf.if %94 {
        %c0_43 = arith.constant 0 : index
        %c0_44 = arith.constant 0 : index
        %95 = vector.load %arg14[%c0_43, %c0_44] : memref<8x128xf32, #tpu.memory_space<vmem>>, vector<8x128xf32>
        %96 = math.exp %95 : vector<8x128xf32>
        %c0_45 = arith.constant 0 : index
        %c0_46 = arith.constant 0 : index
        %97 = vector.load %arg4[%c0_45, %c0_46] : memref<128x128xf32, #tpu.memory_space<vmem>>, vector<128x128xf32>
        %cst_47 = arith.constant dense<0.000000e+00> : vector<8x128xf32>
        %98 = tpu.matmul %96, %97, %cst_47 {dimension_numbers = #tpu.dot_dimension_numbers<[1], [0], [0], [1], [0, 0, 1, 1], [], []>} : vector<8x128xf32>, vector<128x128xf32>, vector<8x128xf32> -> vector<8x128xf32>
        %c0_48 = arith.constant 0 : index
        %c0_49 = arith.constant 0 : index
        %99 = vector.load %arg6[%c0_48, %c0_49] : memref<1x128xf32, #tpu.memory_space<vmem>>, vector<1x128xf32>
        %100 = vector.broadcast %99 : vector<1x128xf32> to vector<8x128xf32>
        %101 = arith.addf %98, %100 : vector<8x128xf32>
        %c0_50 = arith.constant 0 : index
        %c0_51 = arith.constant 0 : index
        %102 = vector.load %arg13[%c0_50, %c0_51] : memref<8x128xf32, #tpu.memory_space<vmem>>, vector<8x128xf32>
        %103 = arith.addf %101, %102 : vector<8x128xf32>
        %c0_52 = arith.constant 0 : index
        %c0_53 = arith.constant 0 : index
        %104 = vector.load %arg9[%c0_52, %c0_53] : memref<8x128xf32, #tpu.memory_space<vmem>>, vector<8x128xf32>
        tpu.vector_store %arg9[%c0_52, %c0_53], %103 {strides = array<i32>} : memref<8x128xf32, #tpu.memory_space<vmem>>, vector<8x128xf32>,
      } else {
      }
    } else {
    }
    return
  }
  func.func @transform_0(%arg0: i32, %arg1: i32) -> (i32, i32) {
    %c0_i32 = arith.constant 0 : i32
    %c0_i32_0 = arith.constant 0 : i32
    %c0_i32_1 = arith.constant 0 : i32
    return %c0_i32, %c0_i32_0 : i32, i32
  }
  func.func @transform_1(%arg0: i32, %arg1: i32) -> (i32, i32) {
    %c0_i32 = arith.constant 0 : i32
    %c0_i32_0 = arith.constant 0 : i32
    %c0_i32_1 = arith.constant 0 : i32
    return %c0_i32, %c0_i32_0 : i32, i32
  }
  func.func @transform_2(%arg0: i32, %arg1: i32) -> (i32, i32) {
    %c0_i32 = arith.constant 0 : i32
    %c0_i32_0 = arith.constant 0 : i32
    %c0_i32_1 = arith.constant 0 : i32
    return %c0_i32, %c0_i32_0 : i32, i32
  }
  func.func @transform_3(%arg0: i32, %arg1: i32) -> (i32, i32) {
    %c0_i32 = arith.constant 0 : i32
    %c0_i32_0 = arith.constant 0 : i32
    %c0_i32_1 = arith.constant 0 : i32
    return %c0_i32, %c0_i32_0 : i32, i32
  }
  func.func @transform_4(%arg0: i32, %arg1: i32) -> (i32, i32) {
    %c0_i32 = arith.constant 0 : i32
    %c0_i32_0 = arith.constant 0 : i32
    %c0_i32_1 = arith.constant 0 : i32
    return %c0_i32, %c0_i32_0 : i32, i32
  }
  func.func @transform_5(%arg0: i32, %arg1: i32) -> (i32, i32) {
    %c0_i32 = arith.constant 0 : i32
    %c0_i32_0 = arith.constant 0 : i32
    %c0_i32_1 = arith.constant 0 : i32
    return %c0_i32, %c0_i32_0 : i32, i32
  }
  func.func @transform_6(%arg0: i32, %arg1: i32) -> (i32, i32) {
    %c0_i32 = arith.constant 0 : i32
    %c0_i32_0 = arith.constant 0 : i32
    return %arg1, %c0_i32 : i32, i32
  }
  func.func @transform_7(%arg0: i32, %arg1: i32) -> (i32, i32) {
    %c0_i32 = arith.constant 0 : i32
    %c0_i32_0 = arith.constant 0 : i32
    %c0_i32_1 = arith.constant 0 : i32
    return %c0_i32, %c0_i32_0 : i32, i32
  }
}

</mosaic_0001>

<llo_original>
// kernel: tpu_custom_call.1
$region0: #{tpu_custom_call.1}
  #allocation0 [shape = 'u32[]', space=smem, size = 0x4, offset = 0x4, fixed_abs, tag = 'smem constant byte address 0x4 - core index']
  #allocation1 [shape = 'u32[144,128]{1,0:T(1,128)}', space=vmem, size = 0x12000, scoped, tag = 'internal scratch']
  #allocation2 [shape = 'f32[8,256]{1,0:T(8,128)}', space=vmem, size = 0x2000, scoped, tag = 'scratch operand']
  #allocation3 [shape = 'f32[1,8]{1,0:T(1,128)}', space=vmem, size = 0x200, scoped, tag = 'scratch operand']
  #allocation4 [shape = 'f32[1,8]{1,0:T(1,128)}', space=vmem, size = 0x200, scoped, tag = 'scratch operand']
  #allocation5 [shape = 'f32[8,128]{1,0:T(8,128)}', space=vmem, size = 0x1000, scoped, tag = 'scratch operand']
  #allocation6 [shape = 'f32[8,128]{1,0:T(8,128)}', space=vmem, size = 0x1000, scoped, tag = 'scratch operand']
  #allocation7 [shape = 'f32[8,256]{1,0:T(8,128)}', space=vmem, size = 0x2000, scoped, tag = 'scratch operand']
  %s0 = inlined_call_operand.vmem [shape: f32[8,128], index: 0, kind: input, shape index: {}]
  %s1 = inlined_call_operand.hbm [shape: f32[128,256], index: 1, kind: input, shape index: {}]
  %s2 = inlined_call_operand.hbm [shape: f32[128,128], index: 2, kind: input, shape index: {}]
  %s3 = inlined_call_operand.vmem [shape: f32[1,256], index: 3, kind: input, shape index: {}]
  %s4 = inlined_call_operand.vmem [shape: f32[1,128], index: 4, kind: input, shape index: {}]
  %s5 = inlined_call_operand.vmem [shape: f32[16,128], index: 5, kind: input, shape index: {}]
  %s6 = inlined_call_operand.vmem [shape: s32[24,5], index: 6, kind: input, shape index: {}]
  %s7 = inlined_call_operand.hbm [shape: f32[8,128], index: 7, kind: output, shape index: {}]
  %s8 = sld [smem:[#allocation0]]
  $region89: #{tpu_custom_call.1} parent=0
    _
  %s10 = ssub.s32 1, %s8
  %s11 = scalar_select 0, %s10, %s8
  $region1: #{tpu_custom_call.1} parent=0
    #allocation8 [shape = 'u8[131072]{0}', space=vmem, size = 0x20000, scoped, tag = 'input window, operand 1, single buffered']
    #allocation9 [shape = 's32[2]{0}', space=sflag, size = 0x8, scoped, tag = 'scoped memory for tpu_custom_call.1']
    #allocation10 [shape = 's32[2]{0}', space=sflag, size = 0x8, scoped, tag = 'scoped memory for tpu_custom_call.1']
    #allocation11 [shape = 'u8[65536]{0}', space=vmem, size = 0x10000, scoped, tag = 'input window, operand 2, single buffered']
    #allocation12 [shape = 's32[1]{0}', space=sflag, size = 0x4, scoped, tag = 'scoped memory for tpu_custom_call.1']
    #allocation13 [shape = 'u8[4096]{0}', space=vmem, size = 0x1000, scoped, tag = 'output window, operand 0, single buffered']
    %12 = vsyncpa [#allocation9], 0
    %13 = vsyncpa [#allocation12], 0
    %14 = vsyncpa [#allocation10], 0
    loop: start=0, step=1, limit=8
    $region2: #{tpu_custom_call.1} parent=1 // loop_pre_header
      _
    $region3: #{tpu_custom_call.1} parent=1 // loop_header
      %s16 = sphi 0, %s20
      %p17 = scmp.ge.s32.totalorder %s16, 8
      %s23 = sphi 0, %s35
      %s24 = sphi 0, %s31
      %s25 = sphi 0, %s23
      %s26 = sphi 0, %s24
      %s27 = sphi 0, %s25
      %s28 = sphi 0, %s26
      %s36 = sphi 0, %s36
      %s38 = sphi 0, %s36
      %s39 = sphi 0, %s38
      %s53 = sphi 0, %s39
      %s57 = sphi 0, %s57
      %s59 = sphi 0, %s57
      %s60 = sphi 0, %s59
      %s74 = sphi 0, %s60
      %s78 = sphi 0, %s78
      %s80 = sphi 0, %s78
      %s81 = sphi 0, %s80
      %s95 = sphi 0, %s81
      %s99 = sphi 0, %s99
      %s101 = sphi 0, %s99
      %s102 = sphi 0, %s101
      %s116 = sphi 0, %s102
      %s120 = sphi 0, %s120
      %s122 = sphi 0, %s120
      %s123 = sphi 0, %s122
      %s137 = sphi 0, %s123
      %s141 = sphi 0, %s141
      %s143 = sphi 0, %s141
      %s144 = sphi 0, %s143
      %s158 = sphi 0, %s144
      %s164 = sphi 0, %s166
      %s167 = sphi 0, %s164
      %s168 = sphi 0, %s167
      %s184 = sphi 0, %s168
      %s188 = sphi 0, %s188
      %s190 = sphi 0, %s188
      %s191 = sphi 0, %s190
      %s205 = sphi 0, %s191
    $region4: #{tpu_custom_call.1} parent=1 // loop_header_branch
      %19 = sbr.rel (%p17) target = $region8
    $region5: #{tpu_custom_call.1} parent=1 // loop_body
      %s21 = ssub.s32 %s16, 1
      %s22 = ssub.s32 %s16, 2
      %s29 = sadd.s32 1, %s24
      %p30 = scmp.ge.s32.totalorder %s29, 3
      %s31 = scalar_select %p30, 0, %s29
      %s32 = sadd.s32 1, %s23
      %s33 = scalar_select %p30, %s32, %s23
      %p34 = scmp.ge.s32.totalorder %s33, 2
      %s35 = scalar_select %p34, 0, %s33
      %s37 = sadd.s32 %s36, 1
      %p40 = scmp.eq.s32.totalorder %s16, 5
      %p41 = scmp.ne.s32.totalorder %s36, %s38
      %p42 = scmp.eq.s32.totalorder %s16, 0
      %p43 = por %p41, %p42
      %p44 = scmp.ne.s32.totalorder %s36, %s38
      %p45 = scmp.eq.s32.totalorder %s21, 5
      %p46 = por %p44, %p45
      %p47 = scmp.ne.s32.totalorder %s38, %s39
      %p48 = scmp.eq.s32.totalorder %s21, 0
      %p49 = por %p47, %p48
      %p50 = scmp.ne.s32.totalorder %s38, %s39
      %p51 = scmp.eq.s32.totalorder %s22, 5
      %p52 = por %p50, %p51
      %p54 = scmp.ne.s32.totalorder %s39, %s53
      %p55 = scmp.eq.s32.totalorder %s22, 0
      %p56 = por %p54, %p55
      %s58 = sadd.s32 %s57, 1
      %p61 = scmp.eq.s32.totalorder %s16, 5
      %p62 = scmp.ne.s32.totalorder %s57, %s59
      %p63 = scmp.eq.s32.totalorder %s16, 0
      %p64 = por %p62, %p63
      %p65 = scmp.ne.s32.totalorder %s57, %s59
      %p66 = scmp.eq.s32.totalorder %s21, 5
      %p67 = por %p65, %p66
      %p68 = scmp.ne.s32.totalorder %s59, %s60
      %p69 = scmp.eq.s32.totalorder %s21, 0
      %p70 = por %p68, %p69
      %p71 = scmp.ne.s32.totalorder %s59, %s60
      %p72 = scmp.eq.s32.totalorder %s22, 5
      %p73 = por %p71, %p72
      %p75 = scmp.ne.s32.totalorder %s60, %s74
      %p76 = scmp.eq.s32.totalorder %s22, 0
      %p77 = por %p75, %p76
      %s79 = sadd.s32 %s78, 1
      %p82 = scmp.eq.s32.totalorder %s16, 5
      %p83 = scmp.ne.s32.totalorder %s78, %s80
      %p84 = scmp.eq.s32.totalorder %s16, 0
      %p85 = por %p83, %p84
      %p86 = scmp.ne.s32.totalorder %s78, %s80
      %p87 = scmp.eq.s32.totalorder %s21, 5
      %p88 = por %p86, %p87
      %p89 = scmp.ne.s32.totalorder %s80, %s81
      %p90 = scmp.eq.s32.totalorder %s21, 0
      %p91 = por %p89, %p90
      %p92 = scmp.ne.s32.totalorder %s80, %s81
      %p93 = scmp.eq.s32.totalorder %s22, 5
      %p94 = por %p92, %p93
      %p96 = scmp.ne.s32.totalorder %s81, %s95
      %p97 = scmp.eq.s32.totalorder %s22, 0
      %p98 = por %p96, %p97
      %s100 = sadd.s32 %s99, 1
      %p103 = scmp.eq.s32.totalorder %s16, 5
      %p104 = scmp.ne.s32.totalorder %s99, %s101
      %p105 = scmp.eq.s32.totalorder %s16, 0
      %p106 = por %p104, %p105
      %p107 = scmp.ne.s32.totalorder %s99, %s101
      %p108 = scmp.eq.s32.totalorder %s21, 5
      %p109 = por %p107, %p108
      %p110 = scmp.ne.s32.totalorder %s101, %s102
      %p111 = scmp.eq.s32.totalorder %s21, 0
      %p112 = por %p110, %p111
      %p113 = scmp.ne.s32.totalorder %s101, %s102
      %p114 = scmp.eq.s32.totalorder %s22, 5
      %p115 = por %p113, %p114
      %p117 = scmp.ne.s32.totalorder %s102, %s116
      %p118 = scmp.eq.s32.totalorder %s22, 0
      %p119 = por %p117, %p118
      %s121 = sadd.s32 %s120, 1
      %p124 = scmp.eq.s32.totalorder %s16, 5
      %p125 = scmp.ne.s32.totalorder %s120, %s122
      %p126 = scmp.eq.s32.totalorder %s16, 0
      %p127 = por %p125, %p126
      %p128 = scmp.ne.s32.totalorder %s120, %s122
      %p129 = scmp.eq.s32.totalorder %s21, 5
      %p130 = por %p128, %p129
      %p131 = scmp.ne.s32.totalorder %s122, %s123
      %p132 = scmp.eq.s32.totalorder %s21, 0
      %p133 = por %p131, %p132
      %p134 = scmp.ne.s32.totalorder %s122, %s123
      %p135 = scmp.eq.s32.totalorder %s22, 5
      %p136 = por %p134, %p135
      %p138 = scmp.ne.s32.totalorder %s123, %s137
      %p139 = scmp.eq.s32.totalorder %s22, 0
      %p140 = por %p138, %p139
      %s142 = sadd.s32 %s141, 1
      %p145 = scmp.eq.s32.totalorder %s16, 5
      %p146 = scmp.ne.s32.totalorder %s141, %s143
      %p147 = scmp.eq.s32.totalorder %s16, 0
      %p148 = por %p146, %p147
      %p149 = scmp.ne.s32.totalorder %s141, %s143
      %p150 = scmp.eq.s32.totalorder %s21, 5
      %p151 = por %p149, %p150
      %p152 = scmp.ne.s32.totalorder %s143, %s144
      %p153 = scmp.eq.s32.totalorder %s21, 0
      %p154 = por %p152, %p153
      %p155 = scmp.ne.s32.totalorder %s143, %s144
      %p156 = scmp.eq.s32.totalorder %s22, 5
      %p157 = por %p155, %p156
      %p159 = scmp.ne.s32.totalorder %s144, %s158
      %p160 = scmp.eq.s32.totalorder %s22, 0
      %p161 = por %p159, %p160
      %s162 = ssub.s32 %s24, %s31
      %p163 = scmp.eq.s32.totalorder %s162, 0
      %s165 = sadd.s32 %s164, 1
      %s166 = scalar_select %p163, %s164, %s165
      %p169 = pneg %p163
      %p170 = scmp.eq.s32.totalorder %s16, 5
      %p171 = por %p169, %p170
      %p172 = scmp.ne.s32.totalorder %s164, %s167
      %p173 = scmp.eq.s32.totalorder %s16, 0
      %p174 = por %p172, %p173
      %p175 = scmp.ne.s32.totalorder %s164, %s167
      %p176 = scmp.eq.s32.totalorder %s21, 5
      %p177 = por %p175, %p176
      %p178 = scmp.ne.s32.totalorder %s167, %s168
      %p179 = scmp.eq.s32.totalorder %s21, 0
      %p180 = por %p178, %p179
      %p181 = scmp.ne.s32.totalorder %s167, %s168
      %p182 = scmp.eq.s32.totalorder %s22, 5
      %p183 = por %p181, %p182
      %p185 = scmp.ne.s32.totalorder %s168, %s184
      %p186 = scmp.eq.s32.totalorder %s22, 0
      %p187 = por %p185, %p186
      %s189 = sadd.s32 %s188, 1
      %p192 = scmp.eq.s32.totalorder %s16, 5
      %p193 = scmp.ne.s32.totalorder %s188, %s190
      %p194 = scmp.eq.s32.totalorder %s16, 0
      %p195 = por %p193, %p194
      %p196 = scmp.ne.s32.totalorder %s188, %s190
      %p197 = scmp.eq.s32.totalorder %s21, 5
      %p198 = por %p196, %p197
      %p199 = scmp.ne.s32.totalorder %s190, %s191
      %p200 = scmp.eq.s32.totalorder %s21, 0
      %p201 = por %p199, %p200
      %p202 = scmp.ne.s32.totalorder %s190, %s191
      %p203 = scmp.eq.s32.totalorder %s22, 5
      %p204 = por %p202, %p203
      %p206 = scmp.ne.s32.totalorder %s191, %s205
      %p207 = scmp.eq.s32.totalorder %s22, 0
      %p208 = por %p206, %p207
      %p209 = scmp.le.s32.totalorder 1, %s16
      %p210 = scmp.lt.s32.totalorder %s16, 7
      %p211 = pnand %p209, %p210
      %p212 = pneg %p211
      // Predicated region
      $region9: #{tpu_custom_call.1} parent=5 // pred_check
        _
      $region10: #{tpu_custom_call.1} parent=5 // pred_check_branch
        %214 = sbr.rel (%p211) target = $region12
      $region11: #{tpu_custom_call.1} parent=5 // pred_region
        %s215 = ssub.s32 %s16, 1
        // Predicated region
        $region13: #{tpu_custom_call.1} parent=11 // pred_check
          %p216 = pneg %p49
        $region14: #{tpu_custom_call.1} parent=11 // pred_check_branch
          %218 = sbr.rel (%p216) target = $region16
        $region15: #{tpu_custom_call.1} parent=11 // pred_region
          _
        $region16: #{tpu_custom_call.1} parent=11 // pred_fallthru
          _
        // Predicated region
        $region17: #{tpu_custom_call.1} parent=11 // pred_check
          %p219 = pneg %p70
        $region18: #{tpu_custom_call.1} parent=11 // pred_check_branch
          %221 = sbr.rel (%p219) target = $region20
        $region19: #{tpu_custom_call.1} parent=11 // pred_region
          %s223 = ssub.s32 4096, 4096
          %224 = vsyncadd [#allocation9], %s223
          %s225 = sshll.u32 [#allocation8], 4
          %s226 = int_to_ptr.vmem [resolvable:$true] %s225
          %231 = dma.hbm_to_vmem [thread:$0]  %s1, 4096, %s226, [#allocation9], 256, 256, 16
        $region20: #{tpu_custom_call.1} parent=11 // pred_fallthru
          _
        // Predicated region
        $region21: #{tpu_custom_call.1} parent=11 // pred_check
          %p232 = pneg %p91
        $region22: #{tpu_custom_call.1} parent=11 // pred_check_branch
          %234 = sbr.rel (%p232) target = $region24
        $region23: #{tpu_custom_call.1} parent=11 // pred_region
          %s236 = ssub.s32 2048, 2048
          %237 = vsyncadd [#allocation12], %s236
          %s238 = sshll.u32 [#allocation11], 4
          %s239 = int_to_ptr.vmem [resolvable:$true] %s238
          %244 = dma.hbm_to_vmem [thread:$0]  %s2, 2048, %s239, [#allocation12], 128, 128, 8
        $region24: #{tpu_custom_call.1} parent=11 // pred_fallthru
          _
        // Predicated region
        $region25: #{tpu_custom_call.1} parent=11 // pred_check
          %p245 = pneg %p112
        $region26: #{tpu_custom_call.1} parent=11 // pred_check_branch
          %247 = sbr.rel (%p245) target = $region28
        $region27: #{tpu_custom_call.1} parent=11 // pred_region
          _
        $region28: #{tpu_custom_call.1} parent=11 // pred_fallthru
          _
        // Predicated region
        $region29: #{tpu_custom_call.1} parent=11 // pred_check
          %p248 = pneg %p133
        $region30: #{tpu_custom_call.1} parent=11 // pred_check_branch
          %250 = sbr.rel (%p248) target = $region32
        $region31: #{tpu_custom_call.1} parent=11 // pred_region
          _
        $region32: #{tpu_custom_call.1} parent=11 // pred_fallthru
          _
        // Predicated region
        $region33: #{tpu_custom_call.1} parent=11 // pred_check
          %p251 = pneg %p154
        $region34: #{tpu_custom_call.1} parent=11 // pred_check_branch
          %253 = sbr.rel (%p251) target = $region36
        $region35: #{tpu_custom_call.1} parent=11 // pred_region
          _
        $region36: #{tpu_custom_call.1} parent=11 // pred_fallthru
          _
      $region12: #{tpu_custom_call.1} parent=5 // pred_fallthru
        _
      %p254 = scmp.lt.s32.totalorder %s16, 6
      // Predicated region
      $region37: #{tpu_custom_call.1} parent=5 // pred_check
        %p255 = pneg %p254
      $region38: #{tpu_custom_call.1} parent=5 // pred_check_branch
        %257 = sbr.rel (%p255) target = $region40
      $region39: #{tpu_custom_call.1} parent=5 // pred_region
        // Predicated region
        $region41: #{tpu_custom_call.1} parent=39 // pred_check
          %p258 = pneg %p174
        $region42: #{tpu_custom_call.1} parent=39 // pred_check_branch
          %260 = sbr.rel (%p258) target = $region44
        $region43: #{tpu_custom_call.1} parent=39 // pred_region
          %p261 = scmp.lt.s32.totalorder %s24, 2
          %s262 = scalar_select %p261, %s24, 2
          %s263 = smul.addr %s262, 8
          %s264 = scalar_lea.vmem %s6, %s263
        $region44: #{tpu_custom_call.1} parent=39 // pred_fallthru
          _
      $region40: #{tpu_custom_call.1} parent=5 // pred_fallthru
        _
      %p265 = scmp.le.s32.totalorder 1, %s16
      %p266 = scmp.lt.s32.totalorder %s16, 7
      %p267 = pnand %p265, %p266
      %p268 = pneg %p267
      // Predicated region
      $region45: #{tpu_custom_call.1} parent=5 // pred_check
        _
      $region46: #{tpu_custom_call.1} parent=5 // pred_check_branch
        %270 = sbr.rel (%p267) target = $region48
      $region47: #{tpu_custom_call.1} parent=5 // pred_region
        %s271 = ssub.s32 %s16, 1
        // Predicated region
        $region49: #{tpu_custom_call.1} parent=47 // pred_check
          %p272 = pneg %p70
        $region50: #{tpu_custom_call.1} parent=47 // pred_check_branch
          %274 = sbr.rel (%p272) target = $region52
        $region51: #{tpu_custom_call.1} parent=47 // pred_region
          %275 = dma.done [#allocation9], 4096
        $region52: #{tpu_custom_call.1} parent=47 // pred_fallthru
          _
        // Predicated region
        $region53: #{tpu_custom_call.1} parent=47 // pred_check
          %p276 = pneg %p91
        $region54: #{tpu_custom_call.1} parent=47 // pred_check_branch
          %278 = sbr.rel (%p276) target = $region56
        $region55: #{tpu_custom_call.1} parent=47 // pred_region
          %279 = dma.done [#allocation12], 2048
        $region56: #{tpu_custom_call.1} parent=47 // pred_fallthru
          _
        %p280 = pneg %p49
        %p281 = pneg %p46
        %p282 = pneg %p70
        %p283 = pneg %p67
        %p284 = pneg %p91
        %p285 = pneg %p88
        %p286 = pneg %p112
        %p287 = pneg %p109
        %p288 = pneg %p133
        %p289 = pneg %p130
        %p290 = pneg %p154
        %p291 = pneg %p151
        %p292 = scmp.lt.s32.totalorder %s26, 2
        %s293 = scalar_select %p292, %s26, 2
        %s294 = smul.addr %s293, 8
        %s295 = scalar_lea.vmem %s6, %s294
        %p296 = pneg %p180
        %p297 = pneg %p177
        %p298 = pneg %p201
        %p299 = pneg %p198
        %p300 = scmp.lt.s32.totalorder %s26, 2
        %s301 = scalar_select %p300, %s26, 2
        %s302 = smul.addr %s301, 8
        %s303 = scalar_lea.vmem %s6, %s302
        %p304 = scmp.eq.s32.totalorder %s25, 0
        %p305 = scmp.eq.s32.totalorder %s26, 0
        %p306 = pnand %p304, %p305
        %p307 = pneg %p306
        // Predicated region
        $region57: #{tpu_custom_call.1} parent=47 // pred_check
          _
        $region58: #{tpu_custom_call.1} parent=47 // pred_check_branch
          %309 = sbr.rel (%p306) target = $region60
        $region59: #{tpu_custom_call.1} parent=47 // pred_region
          %v310 = vld [vmem:[%s0] sm:$0xff]
          %v311 = vld [vmem:[#allocation8] sm:$0xff]
          %v312 = vld [vmem:[#allocation8 + $0x8] sm:$0xff]
          %v313 = vld [vmem:[#allocation8 + $0x10] sm:$0xff]
          %v314 = vld [vmem:[#allocation8 + $0x18] sm:$0xff]
          %v315 = vld [vmem:[#allocation8 + $0x20] sm:$0xff]
          %v316 = vld [vmem:[#allocation8 + $0x28] sm:$0xff]
          %v317 = vld [vmem:[#allocation8 + $0x30] sm:$0xff]
          %v318 = vld [vmem:[#allocation8 + $0x38] sm:$0xff]
          %v319 = vld [vmem:[#allocation8 + $0x40] sm:$0xff]
          %v320 = vld [vmem:[#allocation8 + $0x48] sm:$0xff]
          %v321 = vld [vmem:[#allocation8 + $0x50] sm:$0xff]
          %v322 = vld [vmem:[#allocation8 + $0x58] sm:$0xff]
          %v323 = vld [vmem:[#allocation8 + $0x60] sm:$0xff]
          %v324 = vld [vmem:[#allocation8 + $0x68] sm:$0xff]
          %v325 = vld [vmem:[#allocation8 + $0x70] sm:$0xff]
          %v326 = vld [vmem:[#allocation8 + $0x78] sm:$0xff]
          %v327 = vld [vmem:[#allocation8 + $0x80] sm:$0xff]
          %v328 = vld [vmem:[#allocation8 + $0x88] sm:$0xff]
          %v329 = vld [vmem:[#allocation8 + $0x90] sm:$0xff]
          %v330 = vld [vmem:[#allocation8 + $0x98] sm:$0xff]
          %v331 = vld [vmem:[#allocation8 + $0xa0] sm:$0xff]
          %v332 = vld [vmem:[#allocation8 + $0xa8] sm:$0xff]
          %v333 = vld [vmem:[#allocation8 + $0xb0] sm:$0xff]
          %v334 = vld [vmem:[#allocation8 + $0xb8] sm:$0xff]
          %v335 = vld [vmem:[#allocation8 + $0xc0] sm:$0xff]
          %v336 = vld [vmem:[#allocation8 + $0xc8] sm:$0xff]
          %v337 = vld [vmem:[#allocation8 + $0xd0] sm:$0xff]
          %v338 = vld [vmem:[#allocation8 + $0xd8] sm:$0xff]
          %v339 = vld [vmem:[#allocation8 + $0xe0] sm:$0xff]
          %v340 = vld [vmem:[#allocation8 + $0xe8] sm:$0xff]
          %v341 = vld [vmem:[#allocation8 + $0xf0] sm:$0xff]
          %v342 = vld [vmem:[#allocation8 + $0xf8] sm:$0xff]
          %v343 = vld [vmem:[%s3] sm:$0x3]
          %v345 = vlaneseq
          %v346 = vshrl.u32 %v345, 7
          %v347 = vsub.s32 0, %v346
          %v348 = vrot.slane %v343, %v347
          %v349 = vlaneseq
          %v350 = vshrl.u32 %v349, 7
          %v351 = vsub.s32 1, %v350
          %v352 = vrot.slane %v343, %v351
          %355 = vmatprep.subr.mxu0 %v342
          %356 = vmatpush1.msra.mxu0 %v341
          %357 = vmatprep.subr.mxu0 %v340
          %358 = vmatpush1.msra.mxu0 %v339
          %359 = vmatprep.subr.mxu0 %v338
          %360 = vmatpush1.msra.mxu0 %v337
          %361 = vmatprep.subr.mxu0 %v336
          %362 = vmatpush1.msra.mxu0 %v335
          %363 = vmatprep.subr.mxu0 %v334
          %364 = vmatpush1.msra.mxu0 %v333
          %365 = vmatprep.subr.mxu0 %v332
          %366 = vmatpush1.msra.mxu0 %v331
          %367 = vmatprep.subr.mxu0 %v330
          %368 = vmatpush1.msra.mxu0 %v329
          %369 = vmatprep.subr.mxu0 %v328
          %370 = vmatpush1.msra.mxu0 %v327
          %371 = vmatprep.subr.mxu0 %v326
          %372 = vmatpush1.msra.mxu0 %v325
          %373 = vmatprep.subr.mxu0 %v324
          %374 = vmatpush1.msra.mxu0 %v323
          %375 = vmatprep.subr.mxu0 %v322
          %376 = vmatpush1.msra.mxu0 %v321
          %377 = vmatprep.subr.mxu0 %v320
          %378 = vmatpush1.msra.mxu0 %v319
          %379 = vmatprep.subr.mxu0 %v318
          %380 = vmatpush1.msra.mxu0 %v317
          %381 = vmatprep.subr.mxu0 %v316
          %382 = vmatpush1.msra.mxu0 %v315
          %383 = vmatprep.subr.mxu0 %v314
          %384 = vmatpush1.msra.mxu0 %v313
          %385 = vmatprep.subr.mxu0 %v312
          %386 = vmatpush1.msra.mxu0 %v311
          %387 = vmatprep.subr.mxu0 0.0
          %388 = vmatpush2.msra.mxu0 0.0
          %389 = vmatprep.subr.mxu0 0.0
          %390 = vmatpush2.msra.mxu0 0.0
          %391 = vmatprep.subr.mxu0 0.0
          %392 = vmatpush2.msra.mxu0 0.0
          %393 = vmatprep.subr.mxu0 0.0
          %394 = vmatpush2.msra.mxu0 0.0
          %395 = vmatprep.subr.mxu0 0.0
          %396 = vmatpush2.msra.mxu0 0.0
          %397 = vmatprep.subr.mxu0 0.0
          %398 = vmatpush2.msra.mxu0 0.0
          %399 = vmatprep.subr.mxu0 0.0
          %400 = vmatpush2.msra.mxu0 0.0
          %401 = vmatprep.subr.mxu0 0.0
          %402 = vmatpush2.msra.mxu0 0.0
          %403 = vmatprep.subr.mxu0 0.0
          %404 = vmatpush2.msra.mxu0 0.0
          %405 = vmatprep.subr.mxu0 0.0
          %406 = vmatpush2.msra.mxu0 0.0
          %407 = vmatprep.subr.mxu0 0.0
          %408 = vmatpush2.msra.mxu0 0.0
          %409 = vmatprep.subr.mxu0 0.0
          %410 = vmatpush2.msra.mxu0 0.0
          %411 = vmatprep.subr.mxu0 0.0
          %412 = vmatpush2.msra.mxu0 0.0
          %413 = vmatprep.subr.mxu0 0.0
          %414 = vmatpush2.msra.mxu0 0.0
          %415 = vmatprep.subr.mxu0 0.0
          %416 = vmatpush2.msra.mxu0 0.0
          %417 = vmatprep.subr.mxu0 0.0
          %418 = vmatpush2.msra.mxu0 0.0
          %419 = vmatprep.mubr.f32.mxu0 0.0
          %420 = vmatmul.mubr.f32.gmra.mxu0 %v310
          %v421 = vpop.f32.mrf.mxu0
          %v422 = vadd.f32 %v348, %v421
          %v423 = vpop.f32.mrf.mxu0
          %v424 = vadd.f32 %v352, %v423
          %425 = vdwg.mxu0
          %426 = vst [vmem:[#allocation2] sm:$0xff] %v422
          %427 = vst [vmem:[#allocation2 + $0x8] sm:$0xff] %v424
          %vm428 = vcmask 57344
          %429 = vst.msk [vmem:[#allocation3] sm:$0x1] %vm428, 0.0
          %430 = vst [vmem:[#allocation5] sm:$0xff] 0.0
          %431 = vst [vmem:[#allocation6] sm:$0xff] 0.0
        $region60: #{tpu_custom_call.1} parent=47 // pred_fallthru
          _
        %v432 = vld [vmem:[%s303] sm:$0xff]
        %v433 = vlaneseq
        %v434 = vand.u32 %v433, 127
        %435 = vset.pattern.permute.xlu0 1
        %436 = vperm.xlu0 %435, %v432
        %v437 = vpop.permute.xlu0 %436
        %vm438 = vcmp.eq.s32.totalorder %v437, %v434
        // Predicated region
        $region61: #{tpu_custom_call.1} parent=47 // pred_check
          %p439 = pneg %p304
        $region62: #{tpu_custom_call.1} parent=47 // pred_check_branch
          %441 = sbr.rel (%p439) target = $region64
        $region63: #{tpu_custom_call.1} parent=47 // pred_region
          %v442 = vld [vmem:[#allocation3] sm:$0x1]
          %v443 = vsel %vm438, 1, 0
          %v444 = vcvt.s32.f32 %v443
          %vm445 = vcmask 64512
          %v446 = vsel %vm445, %v444, 0.0
          %v447 = vrot.slane %v446, 4
          %v448 = vadd.f32 %v446, %v447
          %v449 = vrot.slane %v448, 2
          %v450 = vadd.f32 %v448, %v449
          %v451 = vrot.slane %v450, 1
          %v452 = vadd.f32 %v450, %v451
          %v453 = vadd.f32 %v442, %v452
          %vm454 = vcmask 57344
          %455 = vst.msk [vmem:[#allocation3] sm:$0x1] %vm454, %v453
        $region64: #{tpu_custom_call.1} parent=47 // pred_fallthru
          _
        %p456 = scmp.eq.s32.totalorder %s25, 1
        %p457 = pnand %p456, %p305
        %p458 = pneg %p457
        // Predicated region
        $region65: #{tpu_custom_call.1} parent=47 // pred_check
          _
        $region66: #{tpu_custom_call.1} parent=47 // pred_check_branch
          %460 = sbr.rel (%p457) target = $region68
        $region67: #{tpu_custom_call.1} parent=47 // pred_region
          %v461 = vld [vmem:[#allocation3] sm:$0x1]
          %vm462 = vcmp.gt.f32.partialorder %v461, 0.0
          %v463 = vrsqrt.pop %v461
          %v464 = vsel %vm462, %v463, 0.0
          %vm465 = vcmask 57344
          %466 = vst.msk [vmem:[#allocation4] sm:$0x1] %vm465, %v464
        $region68: #{tpu_custom_call.1} parent=47 // pred_fallthru
          _
        // Predicated region
        $region69: #{tpu_custom_call.1} parent=47 // pred_check
          %p467 = pneg %p456
        $region70: #{tpu_custom_call.1} parent=47 // pred_check_branch
          %469 = sbr.rel (%p467) target = $region72
        $region71: #{tpu_custom_call.1} parent=47 // pred_region
          %v470 = vld [vmem:[%s303] sm:$0xff]
          %471 = vset.pattern.permute.xlu0 0
          %472 = vperm.xlu0 %471, %v470
          %v473 = vpop.permute.xlu0 %472
          %vm474 = vcmp.eq.s32.totalorder %v473, %v434
          %v475 = vld [vmem:[#allocation4] sm:$0x1]
          %v477 = vlaneseq
          %v478 = vshrl.u32 %v477, 7
          %v479 = vsub.s32 0, %v478
          %v480 = vrot.slane %v475, %v479
          %v482 = vsel %vm474, %v480, 0.0
          %vm483 = vcmask 64512
          %v484 = vsel %vm483, %v482, 0.0
          %485 = vadd.xlane.f32.xlu0 %v484
          %v486 = vpop.xlane.xlu0 %485
          %v487 = vsel %vm438, %v480, 0.0
          %v488 = vsel %vm483, %v487, 0.0
          %489 = vadd.xlane.f32.xlu0 %v488
          %v490 = vpop.xlane.xlu0 %489
          %v491 = vmul.f32 %v486, %v490
          %492 = vset.pattern.permute.xlu0 2
          %493 = vperm.xlu0 %492, %v470
          %v494 = vpop.permute.xlu0 %493
          %vm495 = vcmp.eq.s32.totalorder %v494, %v434
          %v496 = vsel %vm495, 1, 0
          %v497 = vcvt.s32.f32 %v496
          %498 = vset.pattern.permute.xlu0 3
          %499 = vperm.xlu0 %498, %v470
          %v500 = vpop.permute.xlu0 %499
          %vm501 = vcmp.eq.s32.totalorder %v500, %v434
          %v502 = vsel %vm501, 1, 0
          %v503 = vcvt.s32.f32 %v502
          %v504 = vadd.f32 %v497, %v503
          %505 = vset.pattern.permute.xlu0 4
          %506 = vperm.xlu0 %505, %v470
          %v507 = vpop.permute.xlu0 %506
          %vm508 = vcmp.eq.s32.totalorder %v507, %v434
          %v509 = vsel %vm508, 1, 0
          %v510 = vcvt.s32.f32 %v509
          %v511 = vadd.f32 %v504, %v510
          %v512 = vld [vmem:[%s5] sm:$0xff]
          %v513 = vld [vmem:[%s5 + $0x8] sm:$0xff]
          %vm514 = vcmask 130048
          %v516 = vsel %vm514, %v511, 0
          %518 = vmatprep.subr.mxu0 0.0
          %519 = vmatpush1.msra.mxu0 0.0
          %520 = vmatprep.subr.mxu0 0.0
          %521 = vmatpush1.msra.mxu0 0.0
          %522 = vmatprep.subr.mxu0 0.0
          %523 = vmatpush1.msra.mxu0 0.0
          %524 = vmatprep.subr.mxu0 0.0
          %525 = vmatpush1.msra.mxu0 0.0
          %526 = vmatprep.subr.mxu0 0.0
          %527 = vmatpush1.msra.mxu0 0.0
          %528 = vmatprep.subr.mxu0 0.0
          %529 = vmatpush1.msra.mxu0 0.0
          %530 = vmatprep.subr.mxu0 0.0
          %531 = vmatpush1.msra.mxu0 0.0
          %532 = vmatprep.subr.mxu0 0.0
          %533 = vmatpush1.msra.mxu0 0.0
          %534 = vmatprep.subr.mxu0 0.0
          %535 = vmatpush1.msra.mxu0 0.0
          %536 = vmatprep.subr.mxu0 0.0
          %537 = vmatpush1.msra.mxu0 0.0
          %538 = vmatprep.subr.mxu0 0.0
          %539 = vmatpush1.msra.mxu0 0.0
          %540 = vmatprep.subr.mxu0 0.0
          %541 = vmatpush1.msra.mxu0 0.0
          %542 = vmatprep.subr.mxu0 0.0
          %543 = vmatpush1.msra.mxu0 0.0
          %544 = vmatprep.subr.mxu0 0.0
          %545 = vmatpush1.msra.mxu0 0.0
          %546 = vmatprep.subr.mxu0 0.0
          %547 = vmatpush1.msra.mxu0 %v513
          %548 = vmatprep.subr.mxu0 0.0
          %549 = vmatpush1.msra.mxu0 %v512
          %550 = vmatprep.subr.mxu0 0.0
          %551 = vmatpush2.msra.mxu0 0.0
          %552 = vmatprep.subr.mxu0 0.0
          %553 = vmatpush2.msra.mxu0 0.0
          %554 = vmatprep.subr.mxu0 0.0
          %555 = vmatpush2.msra.mxu0 0.0
          %556 = vmatprep.subr.mxu0 0.0
          %557 = vmatpush2.msra.mxu0 0.0
          %558 = vmatprep.subr.mxu0 0.0
          %559 = vmatpush2.msra.mxu0 0.0
          %560 = vmatprep.subr.mxu0 0.0
          %561 = vmatpush2.msra.mxu0 0.0
          %562 = vmatprep.subr.mxu0 0.0
          %563 = vmatpush2.msra.mxu0 0.0
          %564 = vmatprep.subr.mxu0 0.0
          %565 = vmatpush2.msra.mxu0 0.0
          %566 = vmatprep.subr.mxu0 0.0
          %567 = vmatpush2.msra.mxu0 0.0
          %568 = vmatprep.subr.mxu0 0.0
          %569 = vmatpush2.msra.mxu0 0.0
          %570 = vmatprep.subr.mxu0 0.0
          %571 = vmatpush2.msra.mxu0 0.0
          %572 = vmatprep.subr.mxu0 0.0
          %573 = vmatpush2.msra.mxu0 0.0
          %574 = vmatprep.subr.mxu0 0.0
          %575 = vmatpush2.msra.mxu0 0.0
          %576 = vmatprep.subr.mxu0 0.0
          %577 = vmatpush2.msra.mxu0 0.0
          %578 = vmatprep.subr.mxu0 0.0
          %579 = vmatpush2.msra.mxu0 0.0
          %580 = vmatprep.subr.mxu0 0.0
          %581 = vmatpush2.msra.mxu0 0.0
          %582 = vmatprep.mubr.f32.mxu0 0.0
          %583 = vmatmul.mubr.f32.gmra.mxu0 %v516
          %v584 = vpop.f32.mrf.mxu0
          %v585 = vadd.f32 0.0, %v584
          %v586 = vpop.f32.mrf.mxu0
          %587 = vdwg.mxu0
          %v588 = vsel %vm474, 1, 0
          %v589 = vcvt.s32.f32 %v588
          %v590 = vld [vmem:[#allocation2] sm:$0xff]
          %v591 = vld [vmem:[#allocation2 + $0x8] sm:$0xff]
          %v593 = vsel %vm483, %v589, 0
          %595 = vmatprep.subr.mxu0 0.0
          %596 = vmatpush1.msra.mxu0 0.0
          %597 = vmatprep.subr.mxu0 0.0
          %598 = vmatpush1.msra.mxu0 0.0
          %599 = vmatprep.subr.mxu0 0.0
          %600 = vmatpush1.msra.mxu0 0.0
          %601 = vmatprep.subr.mxu0 0.0
          %602 = vmatpush1.msra.mxu0 0.0
          %603 = vmatprep.subr.mxu0 0.0
          %604 = vmatpush1.msra.mxu0 0.0
          %605 = vmatprep.subr.mxu0 0.0
          %606 = vmatpush1.msra.mxu0 0.0
          %607 = vmatprep.subr.mxu0 0.0
          %608 = vmatpush1.msra.mxu0 0.0
          %609 = vmatprep.subr.mxu0 0.0
          %610 = vmatpush1.msra.mxu0 0.0
          %611 = vmatprep.subr.mxu0 0.0
          %612 = vmatpush1.msra.mxu0 0.0
          %613 = vmatprep.subr.mxu0 0.0
          %614 = vmatpush1.msra.mxu0 0.0
          %615 = vmatprep.subr.mxu0 0.0
          %616 = vmatpush1.msra.mxu0 0.0
          %617 = vmatprep.subr.mxu0 0.0
          %618 = vmatpush1.msra.mxu0 0.0
          %619 = vmatprep.subr.mxu0 0.0
          %620 = vmatpush1.msra.mxu0 0.0
          %621 = vmatprep.subr.mxu0 0.0
          %622 = vmatpush1.msra.mxu0 0.0
          %623 = vmatprep.subr.mxu0 0.0
          %624 = vmatpush1.msra.mxu0 0.0
          %625 = vmatprep.subr.mxu0 %v591
          %626 = vmatpush1.msra.mxu0 %v590
          %627 = vmatprep.subr.mxu0 0.0
          %628 = vmatpush2.msra.mxu0 0.0
          %629 = vmatprep.subr.mxu0 0.0
          %630 = vmatpush2.msra.mxu0 0.0
          %631 = vmatprep.subr.mxu0 0.0
          %632 = vmatpush2.msra.mxu0 0.0
          %633 = vmatprep.subr.mxu0 0.0
          %634 = vmatpush2.msra.mxu0 0.0
          %635 = vmatprep.subr.mxu0 0.0
          %636 = vmatpush2.msra.mxu0 0.0
          %637 = vmatprep.subr.mxu0 0.0
          %638 = vmatpush2.msra.mxu0 0.0
          %639 = vmatprep.subr.mxu0 0.0
          %640 = vmatpush2.msra.mxu0 0.0
          %641 = vmatprep.subr.mxu0 0.0
          %642 = vmatpush2.msra.mxu0 0.0
          %643 = vmatprep.subr.mxu0 0.0
          %644 = vmatpush2.msra.mxu0 0.0
          %645 = vmatprep.subr.mxu0 0.0
          %646 = vmatpush2.msra.mxu0 0.0
          %647 = vmatprep.subr.mxu0 0.0
          %648 = vmatpush2.msra.mxu0 0.0
          %649 = vmatprep.subr.mxu0 0.0
          %650 = vmatpush2.msra.mxu0 0.0
          %651 = vmatprep.subr.mxu0 0.0
          %652 = vmatpush2.msra.mxu0 0.0
          %653 = vmatprep.subr.mxu0 0.0
          %654 = vmatpush2.msra.mxu0 0.0
          %655 = vmatprep.subr.mxu0 0.0
          %656 = vmatpush2.msra.mxu0 0.0
          %657 = vmatprep.subr.mxu0 0.0
          %658 = vmatpush2.msra.mxu0 0.0
          %659 = vmatprep.mubr.f32.mxu0 0.0
          %660 = vmatmul.mubr.f32.gmra.mxu0 %v593
          %v661 = vpop.f32.mrf.mxu0
          %v662 = vadd.f32 0.0, %v661
          %v663 = vpop.f32.mrf.mxu0
          %v664 = vadd.f32 0.0, %v663
          %665 = vdwg.mxu0
          %v666 = vadd.f32 %v662, %v585
          %v667 = vmax.f32 %v666, 0.0
          %v668 = vmul.f32 %v491, %v667
          %v669 = vadd.f32 %v664, %v585
          %v670 = vmax.f32 %v669, 0.0
          %v671 = vmul.f32 %v491, %v670
          %vm672 = vcmp.gt.f32.partialorder %v671, 0.0
          %v673 = vlog2.pop %v671
          %v674 = vmul.f32 %v673, 0.6931472
          %v675 = vsel %vm672, %v674, -1e+30
          %676 = vst [vmem:[#allocation7] sm:$0xff] %v668
          %677 = vst [vmem:[#allocation7 + $0x8] sm:$0xff] %v675
          %v678 = vsel %vm438, 1, 0
          %v679 = vcvt.s32.f32 %v678
          %v680 = vld [vmem:[#allocation7] sm:$0xff]
          %v681 = vld [vmem:[#allocation7 + $0x8] sm:$0xff]
          %682 = vxpose.xlu0.b32.start [1/16] %v679, 128
          %683 = vxpose.xlu0.b32.cont [2/16] 0.0, 128
          %684 = vxpose.xlu0.b32.cont [3/16] 0.0, 128
          %685 = vxpose.xlu0.b32.cont [4/16] 0.0, 128
          %686 = vxpose.xlu0.b32.cont [5/16] 0.0, 128
          %687 = vxpose.xlu0.b32.cont [6/16] 0.0, 128
          %688 = vxpose.xlu0.b32.cont [7/16] 0.0, 128
          %689 = vxpose.xlu0.b32.cont [8/16] 0.0, 128
          %690 = vxpose.xlu0.b32.cont [9/16] 0.0, 128
          %691 = vxpose.xlu0.b32.cont [10/16] 0.0, 128
          %692 = vxpose.xlu0.b32.cont [11/16] 0.0, 128
          %693 = vxpose.xlu0.b32.cont [12/16] 0.0, 128
          %694 = vxpose.xlu0.b32.cont [13/16] 0.0, 128
          %695 = vxpose.xlu0.b32.cont [14/16] 0.0, 128
          %696 = vxpose.xlu0.b32.cont [15/16] 0.0, 128
          %697 = vxpose.xlu0.b32.end [16/16] 0.0, 128
          %v698 = vpop.trf.xlu0
          %v699 = vpop.trf.xlu0
          %v700 = vpop.trf.xlu0
          %v701 = vpop.trf.xlu0
          %v702 = vpop.trf.xlu0
          %v703 = vpop.trf.xlu0
          %v704 = vpop.trf.xlu0
          %v705 = vpop.trf.xlu0
          %v706 = vpop.trf.xlu0
          %v707 = vpop.trf.xlu0
          %v708 = vpop.trf.xlu0
          %v709 = vpop.trf.xlu0
          %v710 = vpop.trf.xlu0
          %v711 = vpop.trf.xlu0
          %v712 = vpop.trf.xlu0
          %v713 = vpop.trf.xlu0
          %v715 = vsel %vm483, %v698, 0
          %717 = vmatprep.subr.mxu0 0.0
          %718 = vmatpush1.msra.mxu0 0.0
          %719 = vmatprep.subr.mxu0 0.0
          %720 = vmatpush1.msra.mxu0 0.0
          %721 = vmatprep.subr.mxu0 0.0
          %722 = vmatpush1.msra.mxu0 0.0
          %723 = vmatprep.subr.mxu0 0.0
          %724 = vmatpush1.msra.mxu0 0.0
          %725 = vmatprep.subr.mxu0 0.0
          %726 = vmatpush1.msra.mxu0 0.0
          %727 = vmatprep.subr.mxu0 0.0
          %728 = vmatpush1.msra.mxu0 0.0
          %729 = vmatprep.subr.mxu0 0.0
          %730 = vmatpush1.msra.mxu0 0.0
          %731 = vmatprep.subr.mxu0 0.0
          %732 = vmatpush1.msra.mxu0 0.0
          %733 = vmatprep.subr.mxu0 0.0
          %734 = vmatpush1.msra.mxu0 0.0
          %735 = vmatprep.subr.mxu0 0.0
          %736 = vmatpush1.msra.mxu0 0.0
          %737 = vmatprep.subr.mxu0 0.0
          %738 = vmatpush1.msra.mxu0 0.0
          %739 = vmatprep.subr.mxu0 0.0
          %740 = vmatpush1.msra.mxu0 0.0
          %741 = vmatprep.subr.mxu0 0.0
          %742 = vmatpush1.msra.mxu0 0.0
          %743 = vmatprep.subr.mxu0 0.0
          %744 = vmatpush1.msra.mxu0 0.0
          %745 = vmatprep.subr.mxu0 0.0
          %746 = vmatpush1.msra.mxu0 0.0
          %747 = vmatprep.subr.mxu0 %v681
          %748 = vmatpush1.msra.mxu0 %v680
          %749 = vmatprep.subr.mxu0 0.0
          %750 = vmatpush2.msra.mxu0 0.0
          %751 = vmatprep.subr.mxu0 0.0
          %752 = vmatpush2.msra.mxu0 0.0
          %753 = vmatprep.subr.mxu0 0.0
          %754 = vmatpush2.msra.mxu0 0.0
          %755 = vmatprep.subr.mxu0 0.0
          %756 = vmatpush2.msra.mxu0 0.0
          %757 = vmatprep.subr.mxu0 0.0
          %758 = vmatpush2.msra.mxu0 0.0
          %759 = vmatprep.subr.mxu0 0.0
          %760 = vmatpush2.msra.mxu0 0.0
          %761 = vmatprep.subr.mxu0 0.0
          %762 = vmatpush2.msra.mxu0 0.0
          %763 = vmatprep.subr.mxu0 0.0
          %764 = vmatpush2.msra.mxu0 0.0
          %765 = vmatprep.subr.mxu0 0.0
          %766 = vmatpush2.msra.mxu0 0.0
          %767 = vmatprep.subr.mxu0 0.0
          %768 = vmatpush2.msra.mxu0 0.0
          %769 = vmatprep.subr.mxu0 0.0
          %770 = vmatpush2.msra.mxu0 0.0
          %771 = vmatprep.subr.mxu0 0.0
          %772 = vmatpush2.msra.mxu0 0.0
          %773 = vmatprep.subr.mxu0 0.0
          %774 = vmatpush2.msra.mxu0 0.0
          %775 = vmatprep.subr.mxu0 0.0
          %776 = vmatpush2.msra.mxu0 0.0
          %777 = vmatprep.subr.mxu0 0.0
          %778 = vmatpush2.msra.mxu0 0.0
          %779 = vmatprep.subr.mxu0 0.0
          %780 = vmatpush2.msra.mxu0 0.0
          %781 = vmatprep.mubr.f32.mxu0 0.0
          %782 = vmatmul.mubr.f32.gmra.mxu0 %v715
          %v783 = vpop.f32.mrf.mxu0
          %v784 = vadd.f32 0.0, %v783
          %v785 = vpop.f32.mrf.mxu0
          %v786 = vadd.f32 0.0, %v785
          %787 = vdwg.mxu0
          %v788 = vld [vmem:[#allocation5] sm:$0xff]
          %v789 = vadd.f32 %v788, %v784
          %790 = vst [vmem:[#allocation5] sm:$0xff] %v789
          %v791 = vld [vmem:[#allocation6] sm:$0xff]
          %v792 = vadd.f32 %v791, %v786
          %793 = vst [vmem:[#allocation6] sm:$0xff] %v792
          %p794 = scmp.eq.s32.totalorder %s26, 2
          // Predicated region
          $region73: #{tpu_custom_call.1} parent=71 // pred_check
            %p795 = pneg %p794
          $region74: #{tpu_custom_call.1} parent=71 // pred_check_branch
            %797 = sbr.rel (%p795) target = $region76
          $region75: #{tpu_custom_call.1} parent=71 // pred_region
            %v798 = vld [vmem:[#allocation6] sm:$0xff]
            %v799 = vmul.f32 %v798, 1.442695
            %v800 = vpow.pop %v799
            %v801 = vld [vmem:[#allocation11] sm:$0xff]
            %v802 = vld [vmem:[#allocation11 + $0x8] sm:$0xff]
            %v803 = vld [vmem:[#allocation11 + $0x10] sm:$0xff]
            %v804 = vld [vmem:[#allocation11 + $0x18] sm:$0xff]
            %v805 = vld [vmem:[#allocation11 + $0x20] sm:$0xff]
            %v806 = vld [vmem:[#allocation11 + $0x28] sm:$0xff]
            %v807 = vld [vmem:[#allocation11 + $0x30] sm:$0xff]
            %v808 = vld [vmem:[#allocation11 + $0x38] sm:$0xff]
            %v809 = vld [vmem:[#allocation11 + $0x40] sm:$0xff]
            %v810 = vld [vmem:[#allocation11 + $0x48] sm:$0xff]
            %v811 = vld [vmem:[#allocation11 + $0x50] sm:$0xff]
            %v812 = vld [vmem:[#allocation11 + $0x58] sm:$0xff]
            %v813 = vld [vmem:[#allocation11 + $0x60] sm:$0xff]
            %v814 = vld [vmem:[#allocation11 + $0x68] sm:$0xff]
            %v815 = vld [vmem:[#allocation11 + $0x70] sm:$0xff]
            %v816 = vld [vmem:[#allocation11 + $0x78] sm:$0xff]
            %v817 = vld [vmem:[%s4] sm:$0x1]
            %v819 = vlaneseq
            %v820 = vshrl.u32 %v819, 7
            %v821 = vsub.s32 0, %v820
            %v822 = vrot.slane %v817, %v821
            %824 = vmatprep.subr.mxu0 0.0
            %825 = vmatpush1.msra.mxu0 %v816
            %826 = vmatprep.subr.mxu0 0.0
            %827 = vmatpush1.msra.mxu0 %v815
            %828 = vmatprep.subr.mxu0 0.0
            %829 = vmatpush1.msra.mxu0 %v814
            %830 = vmatprep.subr.mxu0 0.0
            %831 = vmatpush1.msra.mxu0 %v813
            %832 = vmatprep.subr.mxu0 0.0
            %833 = vmatpush1.msra.mxu0 %v812
            %834 = vmatprep.subr.mxu0 0.0
            %835 = vmatpush1.msra.mxu0 %v811
            %836 = vmatprep.subr.mxu0 0.0
            %837 = vmatpush1.msra.mxu0 %v810
            %838 = vmatprep.subr.mxu0 0.0
            %839 = vmatpush1.msra.mxu0 %v809
            %840 = vmatprep.subr.mxu0 0.0
            %841 = vmatpush1.msra.mxu0 %v808
            %842 = vmatprep.subr.mxu0 0.0
            %843 = vmatpush1.msra.mxu0 %v807
            %844 = vmatprep.subr.mxu0 0.0
            %845 = vmatpush1.msra.mxu0 %v806
            %846 = vmatprep.subr.mxu0 0.0
            %847 = vmatpush1.msra.mxu0 %v805
            %848 = vmatprep.subr.mxu0 0.0
            %849 = vmatpush1.msra.mxu0 %v804
            %850 = vmatprep.subr.mxu0 0.0
            %851 = vmatpush1.msra.mxu0 %v803
            %852 = vmatprep.subr.mxu0 0.0
            %853 = vmatpush1.msra.mxu0 %v802
            %854 = vmatprep.subr.mxu0 0.0
            %855 = vmatpush1.msra.mxu0 %v801
            %856 = vmatprep.subr.mxu0 0.0
            %857 = vmatpush2.msra.mxu0 0.0
            %858 = vmatprep.subr.mxu0 0.0
            %859 = vmatpush2.msra.mxu0 0.0
            %860 = vmatprep.subr.mxu0 0.0
            %861 = vmatpush2.msra.mxu0 0.0
            %862 = vmatprep.subr.mxu0 0.0
            %863 = vmatpush2.msra.mxu0 0.0
            %864 = vmatprep.subr.mxu0 0.0
            %865 = vmatpush2.msra.mxu0 0.0
            %866 = vmatprep.subr.mxu0 0.0
            %867 = vmatpush2.msra.mxu0 0.0
            %868 = vmatprep.subr.mxu0 0.0
            %869 = vmatpush2.msra.mxu0 0.0
            %870 = vmatprep.subr.mxu0 0.0
            %871 = vmatpush2.msra.mxu0 0.0
            %872 = vmatprep.subr.mxu0 0.0
            %873 = vmatpush2.msra.mxu0 0.0
            %874 = vmatprep.subr.mxu0 0.0
            %875 = vmatpush2.msra.mxu0 0.0
            %876 = vmatprep.subr.mxu0 0.0
            %877 = vmatpush2.msra.mxu0 0.0
            %878 = vmatprep.subr.mxu0 0.0
            %879 = vmatpush2.msra.mxu0 0.0
            %880 = vmatprep.subr.mxu0 0.0
            %881 = vmatpush2.msra.mxu0 0.0
            %882 = vmatprep.subr.mxu0 0.0
            %883 = vmatpush2.msra.mxu0 0.0
            %884 = vmatprep.subr.mxu0 0.0
            %885 = vmatpush2.msra.mxu0 0.0
            %886 = vmatprep.subr.mxu0 0.0
            %887 = vmatpush2.msra.mxu0 0.0
            %888 = vmatprep.mubr.f32.mxu0 0.0
            %889 = vmatmul.mubr.f32.gmra.mxu0 %v800
            %v890 = vpop.f32.mrf.mxu0
            %v891 = vadd.f32 %v822, %v890
            %v892 = vpop.f32.mrf.mxu0
            %893 = vdwg.mxu0
            %v894 = vld [vmem:[#allocation5] sm:$0xff]
            %v895 = vadd.f32 %v891, %v894
            %896 = vst [vmem:[#allocation13] sm:$0xff] %v895
          $region76: #{tpu_custom_call.1} parent=71 // pred_fallthru
            _
        $region72: #{tpu_custom_call.1} parent=47 // pred_fallthru
          _
        // Predicated region
        $region77: #{tpu_custom_call.1} parent=47 // pred_check
          %p897 = pneg %p198
        $region78: #{tpu_custom_call.1} parent=47 // pred_check_branch
          %899 = sbr.rel (%p897) target = $region80
        $region79: #{tpu_custom_call.1} parent=47 // pred_region
          %s901 = ssub.s32 128, 128
          %902 = vsyncadd [#allocation10], %s901
          %s904 = sshll.u32 [#allocation13], 4
          %s905 = int_to_ptr.vmem [resolvable:$true] %s904
          %907 = dma.vmem_to_hbm [thread:$0]  %s905, 128, %s7, [#allocation10]
        $region80: #{tpu_custom_call.1} parent=47 // pred_fallthru
          _
        // Predicated region
        $region81: #{tpu_custom_call.1} parent=47 // pred_check
          %p908 = pneg %p198
        $region82: #{tpu_custom_call.1} parent=47 // pred_check_branch
          %910 = sbr.rel (%p908) target = $region84
        $region83: #{tpu_custom_call.1} parent=47 // pred_region
          %911 = dma.done [#allocation10], 128
        $region84: #{tpu_custom_call.1} parent=47 // pred_fallthru
          _
      $region48: #{tpu_custom_call.1} parent=5 // pred_fallthru
        _
      %p912 = scmp.le.s32.totalorder 2, %s16
      // Predicated region
      $region85: #{tpu_custom_call.1} parent=5 // pred_check
        %p913 = pneg %p912
      $region86: #{tpu_custom_call.1} parent=5 // pred_check_branch
        %915 = sbr.rel (%p913) target = $region88
      $region87: #{tpu_custom_call.1} parent=5 // pred_region
        %s916 = ssub.s32 %s16, 2
      $region88: #{tpu_custom_call.1} parent=5 // pred_fallthru
        _
    $region6: #{tpu_custom_call.1} parent=1 // loop_footer
      %s20 = sadd.s32 1, %s16
    $region7: #{tpu_custom_call.1} parent=1 // loop_footer_branch
      %15 = sbr.rel target = $region3
    $region8: #{tpu_custom_call.1} parent=1 // loop_exit
      _
    %917 = vsyncpa [#allocation9], 1
    %s918 = scalar_lea.sflag [#allocation9], 1
    %919 = vsyncpa %s918, 1
    %920 = vsyncpa [#allocation12], 1
    %921 = vsyncpa [#allocation10], 1
    %s922 = scalar_lea.sflag [#allocation10], 1
    %923 = vsyncpa %s922, 1

</llo_original>
